<compile_context>
chip_gen: v5e
topology: v5e:2x2
jax: 0.10.0
libtpu: 0.0.40
codegen_flags: <defaults>
</compile_context>

<pallas_src>
import functools
import re

import jax
import jax.numpy as jnp
from jax.experimental import pallas as pl
from jax.experimental.pallas import tpu as pltpu


_EPS_DEFAULT = 1e-6
_LANE_CANDIDATES = (2048, 1024, 512, 256, 128)


def _actlog_kernel(x_ref, o_ref, *, eps):
    # Elementwise hot path: clamp (VPU) then log (EUP) — both off the
    # vld/vst/DMA critical path, so the kernel is strictly HBM-bound.
    x = x_ref[...].astype(jnp.float32)
    o_ref[...] = jnp.log(jnp.maximum(x, jnp.float32(eps))).astype(o_ref.dtype)


def _tpu_generation():
    """Best-effort TPU generation number (5, 6, 7, ...); 0 if unknown."""
    try:
        kind = jax.devices()[0].device_kind
    except Exception:
        return 0
    m = re.search(r"(\d+)", kind)
    return int(m.group(1)) if m else 0


def _act_log_2d(x2d, eps, block_bytes, gen):
    """Run the ActLog kernel on a lane-dense (rows, lane) slab, lane % 128 == 0."""
    rows, lane = x2d.shape
    itemsize = jnp.dtype(x2d.dtype).itemsize

    # Row tile sized by a byte budget; double buffering of in+out => ~4x block
    # resident, which stays inside the scoped-VMEM default on every generation
    # for the budgets chosen in act_log().
    bytes_per_row = lane * itemsize
    tile_r = max(1, block_bytes // bytes_per_row)
    if tile_r >= rows:
        tile_r = rows  # block equals full array dims: always legal
    else:
        # Packed-sublane alignment: 8 rows (f32), 16 (bf16/f16), 32 (int8/fp8).
        align = max(8, 32 // itemsize)
        tile_r = max(align, (tile_r // align) * align)

    grid = (pl.cdiv(rows, tile_r),)  # partial last block, never a giant fallback

    # v7x has 2 TensorCores, each with its own HBM path: split the row grid
    # across cores. On single-TC chips keep plain "parallel".
    use_core_parallel = gen >= 7 and grid[0] >= 2
    dims = (pltpu.CORE_PARALLEL,) if use_core_parallel else ("parallel",)
    vmem_limit = (48 << 20) if gen >= 7 else None

    n = rows * lane
    cost = pl.CostEstimate(
        flops=n, transcendentals=n, bytes_accessed=2 * n * itemsize
    )

    return pl.pallas_call(
        functools.partial(_actlog_kernel, eps=eps),
        out_shape=jax.ShapeDtypeStruct((rows, lane), x2d.dtype),
        grid=grid,
        in_specs=[pl.BlockSpec((tile_r, lane), lambda i: (i, 0))],
        out_specs=pl.BlockSpec((tile_r, lane), lambda i: (i, 0)),
        input_output_aliases={0: 0},  # same shape/dtype: let XLA donate the buffer
        cost_estimate=cost,
        compiler_params=pltpu.CompilerParams(
            dimension_semantics=dims,
            vmem_limit_bytes=vmem_limit,
        ),
    )(x2d)


def act_log(x, eps=_EPS_DEFAULT, *, block_bytes=None):
    """Pallas implementation of ActLog.forward: y = log(max(x, eps))."""
    orig_shape = x.shape
    total = int(x.size)
    if total == 0:
        return x

    gen = _tpu_generation()
    if block_bytes is None:
        # ~4 MiB blocks on v6e/v7x (amortizes the ~0.35us/step overhead at
        # 1.4-3.2 TB/s), 2 MiB on v5e / unknown (16 MiB scoped-VMEM default).
        block_bytes = (4 << 20) if gen >= 6 else (2 << 20)

    flat = x.reshape(-1)

    # Common case: element count divisible by a 128-multiple lane width.
    # Pure reshape — no pad, no trailing slice, no extra HBM passes.
    lane = next((c for c in _LANE_CANDIDATES if total % c == 0), 0)
    if lane:
        out2d = _act_log_2d(flat.reshape(total // lane, lane), eps, block_bytes, gen)
        return out2d.reshape(orig_shape)

    # Fallback: not a multiple of 128. Kernel on the 128-aligned prefix,
    # plain jnp on the (<128-element) tail — cheaper than pad + slice.
    main = (total // 128) * 128
    if main == 0:
        xf = flat.astype(jnp.float32)
        y = jnp.log(jnp.maximum(xf, jnp.float32(eps))).astype(x.dtype)
        return y.reshape(orig_shape)

    lane = next(c for c in _LANE_CANDIDATES if main % c == 0)
    head = _act_log_2d(
        flat[:main].reshape(main // lane, lane), eps, block_bytes, gen
    ).reshape(-1)
    tail_f = flat[main:].astype(jnp.float32)
    tail = jnp.log(jnp.maximum(tail_f, jnp.float32(eps))).astype(x.dtype)
    return jnp.concatenate([head, tail]).reshape(orig_shape)


def _reference(x, eps=_EPS_DEFAULT):
    # Same math as torch.log(torch.clamp(x, min=eps)), computed in f32.
    xf = x.astype(jnp.float32)
    return jnp.log(jnp.clip(xf, eps, None)).astype(x.dtype)


if __name__ == "__main__":
    key = jax.random.PRNGKey(0)

    # Small NCHW input consistent with a conv-net feature map (128-divisible
    # element count -> single-kernel, zero-copy path).
    x = jax.random.normal(key, (2, 4, 16, 16), dtype=jnp.float32)
    y = jax.block_until_ready(act_log(x))
    y_ref = _reference(x)
    assert y.shape == x.shape and y.dtype == x.dtype
    assert jnp.allclose(y, y_ref, atol=1e-6, rtol=1e-6)

    # Odd, non-128-divisible shape to exercise the prefix-kernel + jnp-tail path.
    key2 = jax.random.PRNGKey(1)
    x2 = jax.random.normal(key2, (2, 4, 14, 7), dtype=jnp.float32)
    y2 = jax.block_until_ready(act_log(x2))
    y2_ref = _reference(x2)
    assert y2.shape == x2.shape and y2.dtype == x2.dtype
    assert jnp.allclose(y2, y2_ref, atol=1e-6, rtol=1e-6)

    # bf16 feature map (exercises packed-sublane alignment + f32 compute path).
    key3 = jax.random.PRNGKey(2)
    x3 = jax.random.normal(key3, (2, 8, 16, 32), dtype=jnp.bfloat16)
    y3 = jax.block_until_ready(act_log(x3))
    y3_ref = _reference(x3)
    assert y3.shape == x3.shape and y3.dtype == x3.dtype
    assert jnp.allclose(
        y3.astype(jnp.float32), y3_ref.astype(jnp.float32), atol=3e-2, rtol=3e-2
    )

    print("KERNEL_OK")
</pallas_src>

<mosaic_0001>
module attributes {stable_mosaic.version = 11 : i64} {
  func.func @_actlog_kernel(%arg0: i32, %arg1: memref<1x2048xf32, #tpu.memory_space<vmem>>, %arg2: memref<1x2048xf32, #tpu.memory_space<vmem>>) attributes {dimension_semantics = [#tpu.dimension_semantics<parallel>], iteration_bounds = array<i64: 1>, scalar_prefetch = 0 : i64, scratch_operands = 0 : i64, tpu.core_type = #tpu.core_type<tc>, window_params = [{transform_indices = @transform_0, window_bounds = array<i64: 1, 2048>}, {transform_indices = @transform_1, window_bounds = array<i64: 1, 2048>}]} {
    %c0 = arith.constant 0 : index
    %c0_0 = arith.constant 0 : index
    %0 = vector.load %arg1[%c0, %c0_0] : memref<1x2048xf32, #tpu.memory_space<vmem>>, vector<1x2048xf32>
    %cst = arith.constant 9.99999997E-7 : f32
    %1 = vector.broadcast %cst : f32 to vector<1x2048xf32>
    %2 = arith.maximumf %0, %1 : vector<1x2048xf32>
    %3 = math.log %2 : vector<1x2048xf32>
    %c0_1 = arith.constant 0 : index
    %c0_2 = arith.constant 0 : index
    %4 = vector.load %arg2[%c0_1, %c0_2] : memref<1x2048xf32, #tpu.memory_space<vmem>>, vector<1x2048xf32>
    tpu.vector_store %arg2[%c0_1, %c0_2], %3 {strides = array<i32>} : memref<1x2048xf32, #tpu.memory_space<vmem>>, vector<1x2048xf32>,
    return
  }
  func.func @transform_0(%arg0: i32) -> (i32, i32) {
    %c0_i32 = arith.constant 0 : i32
    %c0_i32_0 = arith.constant 0 : i32
    return %arg0, %c0_i32 : i32, i32
  }
  func.func @transform_1(%arg0: i32) -> (i32, i32) {
    %c0_i32 = arith.constant 0 : i32
    %c0_i32_0 = arith.constant 0 : i32
    return %arg0, %c0_i32 : i32, i32
  }
}

</mosaic_0001>

<llo_original>
// kernel: tpu_custom_call.1
$region0: #{tpu_custom_call.1}
  #allocation0 [shape = 'u32[]', space=smem, size = 0x4, offset = 0x4, fixed_abs, tag = 'smem constant byte address 0x4 - core index']
  #allocation1 [shape = 'u32[72,128]{1,0:T(1,128)}', space=vmem, size = 0x9000, scoped, tag = 'internal scratch']
  %s0 = inlined_call_operand.hbm [shape: f32[1,2048], index: 0, kind: input, shape index: {}, may-alias: {0,1}]
  %s1 = inlined_call_operand.hbm [shape: f32[1,2048], index: 1, kind: output, shape index: {}, may-alias: {0,1}]
  %s2 = sld [smem:[#allocation0]]
  $region18: #{tpu_custom_call.1} parent=0
    _
  %s4 = ssub.s32 1, %s2
  %s5 = scalar_select 0, %s4, %s2
  $region1: #{tpu_custom_call.1} parent=0
    #allocation2 [shape = 'u8[8192]{0}', space=vmem, size = 0x2000, scoped, tag = 'input window, operand 0, single buffered']
    #allocation3 [shape = 's32[1]{0}', space=sflag, size = 0x4, scoped, tag = 'scoped memory for tpu_custom_call.1']
    #allocation4 [shape = 's32[1]{0}', space=sflag, size = 0x4, scoped, tag = 'scoped memory for tpu_custom_call.1']
    #allocation5 [shape = 'u8[8192]{0}', space=vmem, size = 0x2000, scoped, tag = 'output window, operand 0, single buffered']
    %6 = vsyncpa [#allocation3], 0
    %7 = vsyncpa [#allocation4], 0
    // Predicated region
    $region2: #{tpu_custom_call.1} parent=1 // pred_check
      _
    $region3: #{tpu_custom_call.1} parent=1 // pred_check_branch
      %9 = sbr.rel (0) target = $region5
    $region4: #{tpu_custom_call.1} parent=1 // pred_region
      %11 = vsyncadd [#allocation3], 0
      %s13 = sshll.u32 %s0, 4
      %s14 = int_to_ptr.hbm [resolvable:$true] %s13
      %s15 = sshll.u32 [#allocation2], 4
      %s16 = int_to_ptr.vmem [resolvable:$true] %s15
      %18 = dma.hbm_to_vmem [thread:$0]  %s14, 256, %s16, [#allocation3]
    $region5: #{tpu_custom_call.1} parent=1 // pred_fallthru
      _
    // Predicated region
    $region6: #{tpu_custom_call.1} parent=1 // pred_check
      _
    $region7: #{tpu_custom_call.1} parent=1 // pred_check_branch
      %20 = sbr.rel (0) target = $region9
    $region8: #{tpu_custom_call.1} parent=1 // pred_region
      %22 = dma.done [#allocation3], 256
    $region9: #{tpu_custom_call.1} parent=1 // pred_fallthru
      _
    %v23 = vld [vmem:[#allocation2] sm:$0xff]
    %v24 = vld [vmem:[#allocation2 + $0x8] sm:$0xff]
    %v25 = vmax.f32 %v23, 1e-06
    %v26 = vmax.f32 %v24, 1e-06
    %v27 = vlog2.pop %v25
    %v28 = vmul.f32 %v27, 0.6931472
    %v29 = vlog2.pop %v26
    %v30 = vmul.f32 %v29, 0.6931472
    %31 = vst [vmem:[#allocation5] sm:$0xff] %v28
    %32 = vst [vmem:[#allocation5 + $0x8] sm:$0xff] %v30
    // Predicated region
    $region10: #{tpu_custom_call.1} parent=1 // pred_check
      _
    $region11: #{tpu_custom_call.1} parent=1 // pred_check_branch
      %34 = sbr.rel (0) target = $region13
    $region12: #{tpu_custom_call.1} parent=1 // pred_region
      %36 = vsyncadd [#allocation4], 0
      %s38 = sshll.u32 [#allocation5], 4
      %s39 = int_to_ptr.vmem [resolvable:$true] %s38
      %s40 = sshll.u32 %s1, 4
      %s41 = int_to_ptr.hbm [resolvable:$true] %s40
      %43 = dma.vmem_to_hbm [thread:$0]  %s39, 256, %s41, [#allocation4]
    $region13: #{tpu_custom_call.1} parent=1 // pred_fallthru
      _
    // Predicated region
    $region14: #{tpu_custom_call.1} parent=1 // pred_check
      _
    $region15: #{tpu_custom_call.1} parent=1 // pred_check_branch
      %45 = sbr.rel (0) target = $region17
    $region16: #{tpu_custom_call.1} parent=1 // pred_region
      %47 = dma.done [#allocation4], 256
    $region17: #{tpu_custom_call.1} parent=1 // pred_fallthru
      _
    %48 = vsyncpa [#allocation3], 1
    %49 = vsyncpa [#allocation4], 1

</llo_original>
